<compile_context>
chip_gen: v7x
topology: tpu7x:2x2x1
jax: 0.10.0
libtpu: 0.0.40
codegen_flags: <defaults>
</compile_context>

<pallas_src>
import functools

import jax
import jax.numpy as jnp
from jax.experimental import pallas as pl
from jax.experimental.pallas import tpu as pltpu

# ---- model hyper-parameters (small synthetic sizes) -------------------------
ENTITY_NUM = 50
RELATION_NUM = 10
ENTITY_DIM = 32          # entityEmbDim  (4 * 32 = 128 lanes -> one full vreg row)
RELATION_DIM = 16        # relationEmbDim (<= ENTITY_DIM, matches h[..., :Dr])
SAMPLE_NUM = 3
MARGIN = 1.0
EPS = 1e-6               # torch.nn.PairwiseDistance default eps (added to diff)


# ----------------------------- Pallas kernel --------------------------------
def _transd_loss_kernel(ent_ref, rel_ref, out_ref, *,
                        batch, sample_num, ent_dim, rel_dim, margin, eps):
    D = ent_dim
    ent = ent_ref[...]            # [(1+S)*B, 4*D]  f32
    rel = rel_ref[...]            # [(1+S)*B, 2*D]  f32 (rp, r zero-padded to D)

    hp = ent[:, 0 * D:1 * D]
    h = ent[:, 1 * D:2 * D]
    tp = ent[:, 2 * D:3 * D]
    t = ent[:, 3 * D:4 * D]
    rp = rel[:, 0 * D:1 * D]
    r = rel[:, 1 * D:2 * D]

    # TransD "reduce" projection for every row at once:
    #   hh = rp * <hp, h> + h[:, :Dr];  tt = rp * <tp, t> + t[:, :Dr]
    dot_h = jnp.sum(hp * h, axis=-1, keepdims=True)          # [(1+S)*B, 1]
    dot_t = jnp.sum(tp * t, axis=-1, keepdims=True)          # [(1+S)*B, 1]

    # (hh + r) - tt + eps computed full-D wide; lanes >= Dr are garbage (rp and
    # r are zero there), so zero them with one hoisted lane mask.
    diff = rp * (dot_h - dot_t) + (h - t) + r + eps
    lane = jax.lax.broadcasted_iota(jnp.int32, (1, D), 1)
    diff = jnp.where(lane < rel_dim, diff, 0.0)
    dist = jnp.sqrt(jnp.sum(diff * diff, axis=-1, keepdims=True))   # [(1+S)*B, 1]

    # positives are rows [0, B); negative sample s is rows [B + s*B, B + (s+1)*B)
    posdis = dist[0:batch, :]                                  # [B, 1]
    neg_sum = dist[batch:2 * batch, :]
    for s in range(1, sample_num):                             # tiny aligned adds
        neg_sum = neg_sum + dist[(1 + s) * batch:(2 + s) * batch, :]
    negmean = neg_sum * (1.0 / sample_num)                     # [B, 1]

    # margin ranking hinge, mean over batch
    loss = jnp.mean(jnp.maximum(posdis - negmean + margin, 0.0))
    out_ref[...] = loss.reshape(1, 1)


# ------------------------------ glue (JAX) -----------------------------------
def renorm(table, max_norm):
    # Equivalent of nn.Embedding(max_norm=...) row renorm at lookup time.
    norms = jnp.linalg.norm(table, axis=-1, keepdims=True)
    scale = jnp.where(norms > max_norm, max_norm / (norms + 1e-7), 1.0)
    return table * scale


def sample_negatives(key, triplets, entity_num, sample_num):
    # TODO(synk): torch.rand/randint replaced with jax.random (same semantics,
    # deterministic under PRNGKey, exact torch bit-stream not reproduced).
    B = triplets.shape[0]
    k1, k2 = jax.random.split(key)
    neg = jnp.tile(triplets[:, None, :], (1, sample_num, 1))
    r = (jax.random.uniform(k1, (B, sample_num)) > 0.5).astype(triplets.dtype)
    offset = jax.random.randint(k2, (B, sample_num), 1, entity_num,
                                dtype=triplets.dtype)
    head = (neg[:, :, 0] + r * offset) % entity_num
    tail = (neg[:, :, 2] + (1 - r) * offset) % entity_num
    return neg.at[:, :, 0].set(head).at[:, :, 2].set(tail)


def transd_net_loss(tables, triplets, neg):
    entityEmb, relationEmb, entityEmbP, relationEmbP = tables
    B = triplets.shape[0]
    S = neg.shape[1]
    D, Dr = ENTITY_DIM, RELATION_DIM

    # Row order: B positives, then negatives sample-major (row = B + s*B + b).
    h_idx = jnp.concatenate([triplets[:, 0], neg[..., 0].T.reshape(-1)])
    r_idx = jnp.concatenate([triplets[:, 1], neg[..., 1].T.reshape(-1)])
    t_idx = jnp.concatenate([triplets[:, 2], neg[..., 2].T.reshape(-1)])

    # TODO(synk): at realistic batch sizes, move this gather into the kernel
    # (PrefetchScalarGridSpec with the index arrays as scalar prefetch + row
    # DMAs) and tile B on a 'parallel'/'arbitrary' grid axis with an SMEM/VMEM
    # loss accumulator; unnecessary at B=8.
    hp = entityEmbP[h_idx]
    h = entityEmb[h_idx]
    tp = entityEmbP[t_idx]
    t = entityEmb[t_idx]
    rp = relationEmbP[r_idx]
    r = relationEmb[r_idx]

    # Zero-pad relation-dim vectors to D lanes so the kernel never slices at a
    # non-32-aligned lane offset.
    pad = ((0, 0), (0, D - Dr))
    rp_pad = jnp.pad(rp, pad)
    r_pad = jnp.pad(r, pad)

    ent = jnp.concatenate([hp, h, tp, t], axis=-1).astype(jnp.float32)   # [(1+S)*B, 4*D]
    rel = jnp.concatenate([rp_pad, r_pad], axis=-1).astype(jnp.float32)  # [(1+S)*B, 2*D]

    kernel = functools.partial(
        _transd_loss_kernel,
        batch=B, sample_num=S, ent_dim=D, rel_dim=Dr,
        margin=MARGIN, eps=EPS)

    out = pl.pallas_call(
        kernel,
        in_specs=[pl.BlockSpec(memory_space=pltpu.MemorySpace.VMEM),
                  pl.BlockSpec(memory_space=pltpu.MemorySpace.VMEM)],
        out_specs=pl.BlockSpec(memory_space=pltpu.MemorySpace.VMEM),
        out_shape=jax.ShapeDtypeStruct((1, 1), jnp.float32),
    )(ent, rel)
    return out[0, 0]


def reference_loss(tables, triplets, neg):
    # pure-JAX reference mirroring the PyTorch forward
    entityEmb, relationEmb, entityEmbP, relationEmbP = tables

    def trip_reduce(h, r, t):
        hp, he = entityEmbP[h], entityEmb[h]
        rp, re = relationEmbP[r], relationEmb[r]
        tp, te = entityEmbP[t], entityEmb[t]
        hh = rp * jnp.sum(hp * he, -1, keepdims=True) + he[..., :RELATION_DIM]
        tt = rp * jnp.sum(tp * te, -1, keepdims=True) + te[..., :RELATION_DIM]
        return hh, re, tt

    ph, pr, pt = trip_reduce(triplets[:, 0], triplets[:, 1], triplets[:, 2])
    nh, nr, nt = trip_reduce(neg[..., 0], neg[..., 1], neg[..., 2])
    posdis = jnp.sqrt(jnp.sum((ph + pr - pt + EPS) ** 2, -1))
    negdis = jnp.sqrt(jnp.sum((nh + nr - nt + EPS) ** 2, -1))
    negdis = jnp.mean(negdis, axis=1)
    return jnp.mean(jnp.maximum(posdis - negdis + MARGIN, 0.0))


if __name__ == "__main__":
    key = jax.random.PRNGKey(0)
    ke, kr, kep, krp, kh, krl, kt, ks = jax.random.split(key, 8)

    # deterministic parameter init (nn.Embedding default N(0,1), max_norm=1)
    entityEmb = renorm(jax.random.normal(ke, (ENTITY_NUM, ENTITY_DIM), jnp.float32), 1.0)
    relationEmb = renorm(jax.random.normal(kr, (RELATION_NUM, RELATION_DIM), jnp.float32), 1.0)
    entityEmbP = renorm(jax.random.normal(kep, (ENTITY_NUM, ENTITY_DIM), jnp.float32), 1.0)
    relationEmbP = renorm(jax.random.normal(krp, (RELATION_NUM, RELATION_DIM), jnp.float32), 1.0)
    tables = (entityEmb, relationEmb, entityEmbP, relationEmbP)

    B = 8
    heads = jax.random.randint(kh, (B,), 0, ENTITY_NUM, dtype=jnp.int32)
    rels = jax.random.randint(krl, (B,), 0, RELATION_NUM, dtype=jnp.int32)
    tails = jax.random.randint(kt, (B,), 0, ENTITY_NUM, dtype=jnp.int32)
    triplets = jnp.stack([heads, rels, tails], axis=1)          # (B, 3)

    neg = sample_negatives(ks, triplets, ENTITY_NUM, SAMPLE_NUM)  # (B, S, 3)

    loss = jax.block_until_ready(transd_net_loss(tables, triplets, neg))
    ref = jax.block_until_ready(reference_loss(tables, triplets, neg))
    assert jnp.allclose(loss, ref, rtol=1e-5, atol=1e-5), (loss, ref)
    print("KERNEL_OK")
</pallas_src>

<mosaic_0001>
module attributes {stable_mosaic.version = 11 : i64} {
  func.func @_transd_loss_kernel(%arg0: memref<32x128xf32, #tpu.memory_space<vmem>>, %arg1: memref<32x64xf32, #tpu.memory_space<vmem>>, %arg2: memref<1x1xf32, #tpu.memory_space<vmem>>) attributes {dimension_semantics = [], scalar_prefetch = 0 : i64, scratch_operands = 0 : i64, tpu.core_type = #tpu.core_type<tc>} {
    %c0 = arith.constant 0 : index
    %c0_0 = arith.constant 0 : index
    %0 = vector.load %arg0[%c0, %c0_0] : memref<32x128xf32, #tpu.memory_space<vmem>>, vector<32x128xf32>
    %c0_1 = arith.constant 0 : index
    %c0_2 = arith.constant 0 : index
    %1 = vector.load %arg1[%c0_1, %c0_2] : memref<32x64xf32, #tpu.memory_space<vmem>>, vector<32x64xf32>
    %2 = vector.extract_strided_slice %0 {offsets = [0, 0], sizes = [32, 32], strides = [1, 1]} : vector<32x128xf32> to vector<32x32xf32>
    %3 = vector.extract_strided_slice %0 {offsets = [0, 32], sizes = [32, 32], strides = [1, 1]} : vector<32x128xf32> to vector<32x32xf32>
    %4 = vector.extract_strided_slice %0 {offsets = [0, 64], sizes = [32, 32], strides = [1, 1]} : vector<32x128xf32> to vector<32x32xf32>
    %5 = vector.extract_strided_slice %0 {offsets = [0, 96], sizes = [32, 32], strides = [1, 1]} : vector<32x128xf32> to vector<32x32xf32>
    %6 = vector.extract_strided_slice %1 {offsets = [0, 0], sizes = [32, 32], strides = [1, 1]} : vector<32x64xf32> to vector<32x32xf32>
    %7 = vector.extract_strided_slice %1 {offsets = [0, 32], sizes = [32, 32], strides = [1, 1]} : vector<32x64xf32> to vector<32x32xf32>
    %8 = arith.mulf %2, %3 : vector<32x32xf32>
    %cst = arith.constant dense<0.000000e+00> : vector<32xf32>
    %9 = vector.multi_reduction <add>, %8, %cst [1] : vector<32x32xf32> to vector<32xf32>
    %10 = vector.shape_cast %9 : vector<32xf32> to vector<32x1xf32>
    %11 = arith.mulf %4, %5 : vector<32x32xf32>
    %cst_3 = arith.constant dense<0.000000e+00> : vector<32xf32>
    %12 = vector.multi_reduction <add>, %11, %cst_3 [1] : vector<32x32xf32> to vector<32xf32>
    %13 = vector.shape_cast %12 : vector<32xf32> to vector<32x1xf32>
    %14 = arith.subf %10, %13 : vector<32x1xf32>
    %15 = vector.broadcast %14 : vector<32x1xf32> to vector<32x32xf32>
    %16 = arith.mulf %6, %15 : vector<32x32xf32>
    %17 = arith.subf %3, %5 : vector<32x32xf32>
    %18 = arith.addf %16, %17 : vector<32x32xf32>
    %19 = arith.addf %18, %7 : vector<32x32xf32>
    %cst_4 = arith.constant 9.99999997E-7 : f32
    %20 = vector.broadcast %cst_4 : f32 to vector<32x32xf32>
    %21 = arith.addf %19, %20 : vector<32x32xf32>
    %22 = tpu.iota {dimensions = array<i32: 1>} : vector<1x32xi32>
    %c16_i32 = arith.constant 16 : i32
    %23 = vector.broadcast %c16_i32 : i32 to vector<1x32xi32>
    %24 = arith.cmpi slt, %22, %23 : vector<1x32xi32>
    %cst_5 = arith.constant 0.000000e+00 : f32
    %25 = vector.shape_cast %24 : vector<1x32xi1> to vector<1x32xi1>
    %26 = vector.broadcast %25 : vector<1x32xi1> to vector<32x32xi1>
    %27 = vector.broadcast %cst_5 : f32 to vector<32x32xf32>
    %28 = arith.select %26, %21, %27 : vector<32x32xi1>, vector<32x32xf32>
    %29 = arith.mulf %28, %28 : vector<32x32xf32>
    %cst_6 = arith.constant dense<0.000000e+00> : vector<32xf32>
    %30 = vector.multi_reduction <add>, %29, %cst_6 [1] : vector<32x32xf32> to vector<32xf32>
    %31 = vector.shape_cast %30 : vector<32xf32> to vector<32x1xf32>
    %32 = math.sqrt %31 : vector<32x1xf32>
    %33 = vector.extract_strided_slice %32 {offsets = [0, 0], sizes = [8, 1], strides = [1, 1]} : vector<32x1xf32> to vector<8x1xf32>
    %34 = vector.extract_strided_slice %32 {offsets = [8, 0], sizes = [8, 1], strides = [1, 1]} : vector<32x1xf32> to vector<8x1xf32>
    %35 = vector.extract_strided_slice %32 {offsets = [16, 0], sizes = [8, 1], strides = [1, 1]} : vector<32x1xf32> to vector<8x1xf32>
    %36 = arith.addf %34, %35 : vector<8x1xf32>
    %37 = vector.extract_strided_slice %32 {offsets = [24, 0], sizes = [8, 1], strides = [1, 1]} : vector<32x1xf32> to vector<8x1xf32>
    %38 = arith.addf %36, %37 : vector<8x1xf32>
    %cst_7 = arith.constant 0.333333343 : f32
    %39 = vector.broadcast %cst_7 : f32 to vector<8x1xf32>
    %40 = arith.mulf %38, %39 : vector<8x1xf32>
    %41 = arith.subf %33, %40 : vector<8x1xf32>
    %cst_8 = arith.constant 1.000000e+00 : f32
    %42 = vector.broadcast %cst_8 : f32 to vector<8x1xf32>
    %43 = arith.addf %41, %42 : vector<8x1xf32>
    %cst_9 = arith.constant 0.000000e+00 : f32
    %44 = vector.broadcast %cst_9 : f32 to vector<8x1xf32>
    %45 = arith.maximumf %43, %44 : vector<8x1xf32>
    %46 = vector.shape_cast %45 : vector<8x1xf32> to vector<1x8x1xf32>
    %cst_10 = arith.constant dense<0.000000e+00> : vector<1xf32>
    %47 = vector.multi_reduction <add>, %46, %cst_10 [1, 2] : vector<1x8x1xf32> to vector<1xf32>
    %48 = vector.shape_cast %47 : vector<1xf32> to vector<1x1x1xf32>
    %49 = vector.extract %48[0, 0, 0] : f32 from vector<1x1x1xf32>
    %cst_11 = arith.constant 8.000000e+00 : f32
    %50 = arith.divf %49, %cst_11 : f32
    %51 = vector.broadcast %50 : f32 to vector<1x1xf32>
    %c0_12 = arith.constant 0 : index
    %c0_13 = arith.constant 0 : index
    %52 = vector.load %arg2[%c0_12, %c0_13] : memref<1x1xf32, #tpu.memory_space<vmem>>, vector<1x1xf32>
    tpu.vector_store %arg2[%c0_12, %c0_13], %51 {strides = array<i32>} : memref<1x1xf32, #tpu.memory_space<vmem>>, vector<1x1xf32>,
    return
  }
}

</mosaic_0001>

<llo_original>
// kernel: tpu_custom_call.1
$region0: #{tpu_custom_call.1}
  #allocation0 [shape = 'u32[]', space=smem, size = 0x4, offset = 0x4, fixed_abs, tag = 'smem constant byte address 0x4 - core index']
  #allocation1 [shape = 'u32[144,128]{1,0:T(1,128)}', space=vmem, size = 0x12000, scoped, tag = 'internal scratch']
  %s0 = inlined_call_operand.hbm [shape: f32[32,128], index: 0, kind: input, shape index: {}]
  %s1 = inlined_call_operand.hbm [shape: f32[32,64], index: 1, kind: input, shape index: {}]
  %s2 = inlined_call_operand.hbm [shape: f32[1,1], index: 2, kind: output, shape index: {}]
  %s3 = sld [smem:[#allocation0]]
  $region26: #{tpu_custom_call.1} parent=0
    _
  %s5 = ssub.s32 1, %s3
  %s6 = scalar_select 0, %s5, %s3
  $region1: #{tpu_custom_call.1} parent=0
    #allocation2 [shape = 'u8[16384]{0}', space=vmem, size = 0x4000, scoped, tag = 'input window, operand 0, single buffered']
    #allocation3 [shape = 's32[1]{0}', space=sflag, size = 0x4, scoped, tag = 'scoped memory for tpu_custom_call.1']
    #allocation4 [shape = 's32[1]{0}', space=sflag, size = 0x4, scoped, tag = 'scoped memory for tpu_custom_call.1']
    #allocation5 [shape = 'u8[16384]{0}', space=vmem, size = 0x4000, scoped, tag = 'input window, operand 1, single buffered']
    #allocation6 [shape = 's32[1]{0}', space=sflag, size = 0x4, scoped, tag = 'scoped memory for tpu_custom_call.1']
    #allocation7 [shape = 'u8[512]{0}', space=vmem, size = 0x400, scoped, tag = 'output window, operand 0, single buffered']
    %7 = vsyncpa [#allocation3], 0
    %8 = vsyncpa [#allocation6], 0
    %9 = vsyncpa [#allocation4], 0
    // Predicated region
    $region2: #{tpu_custom_call.1} parent=1 // pred_check
      _
    $region3: #{tpu_custom_call.1} parent=1 // pred_check_branch
      %11 = sbr.rel (0) target = $region5
    $region4: #{tpu_custom_call.1} parent=1 // pred_region
      %s13 = ssub.s32 512, 512
      %14 = vsyncadd [#allocation3], %s13
      %s15 = sshll.u32 [#allocation2], 4
      %s16 = int_to_ptr.vmem [resolvable:$true] %s15
      %21 = dma.hbm_to_vmem [thread:$0]  %s0, 512, %s16, [#allocation3], 128, 128, 8
    $region5: #{tpu_custom_call.1} parent=1 // pred_fallthru
      _
    // Predicated region
    $region6: #{tpu_custom_call.1} parent=1 // pred_check
      _
    $region7: #{tpu_custom_call.1} parent=1 // pred_check_branch
      %23 = sbr.rel (0) target = $region9
    $region8: #{tpu_custom_call.1} parent=1 // pred_region
      %s25 = ssub.s32 512, 512
      %26 = vsyncadd [#allocation6], %s25
      %s27 = sshll.u32 [#allocation5], 4
      %s28 = int_to_ptr.vmem [resolvable:$true] %s27
      %33 = dma.hbm_to_vmem [thread:$0]  %s1, 512, %s28, [#allocation6], 128, 128, 8
    $region9: #{tpu_custom_call.1} parent=1 // pred_fallthru
      _
    // Predicated region
    $region10: #{tpu_custom_call.1} parent=1 // pred_check
      _
    $region11: #{tpu_custom_call.1} parent=1 // pred_check_branch
      %35 = sbr.rel (0) target = $region13
    $region12: #{tpu_custom_call.1} parent=1 // pred_region
      %36 = dma.done [#allocation3], 512
    $region13: #{tpu_custom_call.1} parent=1 // pred_fallthru
      _
    // Predicated region
    $region14: #{tpu_custom_call.1} parent=1 // pred_check
      _
    $region15: #{tpu_custom_call.1} parent=1 // pred_check_branch
      %38 = sbr.rel (0) target = $region17
    $region16: #{tpu_custom_call.1} parent=1 // pred_region
      %39 = dma.done [#allocation6], 512
    $region17: #{tpu_custom_call.1} parent=1 // pred_fallthru
      _
    %v40 = vld [vmem:[#allocation2] sm:$0xff]
    %v41 = vld [vmem:[#allocation2 + $0x8] sm:$0xff]
    %v42 = vld [vmem:[#allocation2 + $0x10] sm:$0xff]
    %v43 = vld [vmem:[#allocation2 + $0x18] sm:$0xff]
    %v44 = vld [vmem:[#allocation5] sm:$0xff]
    %v45 = vld [vmem:[#allocation5 + $0x8] sm:$0xff]
    %v46 = vld [vmem:[#allocation5 + $0x10] sm:$0xff]
    %v47 = vld [vmem:[#allocation5 + $0x18] sm:$0xff]
    %52 = vrot.lane.b32.xlu0 %v40, 96
    %v53 = vpop.permute.xlu0 %52
    %54 = vrot.lane.b32.xlu0 %v41, 96
    %v55 = vpop.permute.xlu0 %54
    %56 = vrot.lane.b32.xlu0 %v42, 96
    %v57 = vpop.permute.xlu0 %56
    %58 = vrot.lane.b32.xlu0 %v43, 96
    %v59 = vpop.permute.xlu0 %58
    %v64 = vmul.f32 %v40, %v53
    %v65 = vmul.f32 %v41, %v55
    %v66 = vmul.f32 %v42, %v57
    %v67 = vmul.f32 %v43, %v59
    %vm68 = vcmask 261120
    %v69 = vsel %vm68, %v64, 0.0
    %70 = vadd.xlane.f32.xlu0 %v69
    %v71 = vpop.xlane.xlu0 %70
    %v72 = vsel %vm68, %v65, 0.0
    %73 = vadd.xlane.f32.xlu0 %v72
    %v74 = vpop.xlane.xlu0 %73
    %v75 = vsel %vm68, %v66, 0.0
    %76 = vadd.xlane.f32.xlu0 %v75
    %v77 = vpop.xlane.xlu0 %76
    %v78 = vsel %vm68, %v67, 0.0
    %79 = vadd.xlane.f32.xlu0 %v78
    %v80 = vpop.xlane.xlu0 %79
    %85 = vrot.lane.b32.xlu0 %v64, 64
    %v86 = vpop.permute.xlu0 %85
    %87 = vrot.lane.b32.xlu0 %v65, 64
    %v88 = vpop.permute.xlu0 %87
    %89 = vrot.lane.b32.xlu0 %v66, 64
    %v90 = vpop.permute.xlu0 %89
    %91 = vrot.lane.b32.xlu0 %v67, 64
    %v92 = vpop.permute.xlu0 %91
    %v97 = vsel %vm68, %v86, 0.0
    %98 = vadd.xlane.f32.xlu0 %v97
    %v99 = vpop.xlane.xlu0 %98
    %v100 = vsel %vm68, %v88, 0.0
    %101 = vadd.xlane.f32.xlu0 %v100
    %v102 = vpop.xlane.xlu0 %101
    %v103 = vsel %vm68, %v90, 0.0
    %104 = vadd.xlane.f32.xlu0 %v103
    %v105 = vpop.xlane.xlu0 %104
    %v106 = vsel %vm68, %v92, 0.0
    %107 = vadd.xlane.f32.xlu0 %v106
    %v108 = vpop.xlane.xlu0 %107
    %v109 = vsub.f32 %v71, %v99
    %v110 = vsub.f32 %v74, %v102
    %v111 = vsub.f32 %v77, %v105
    %v112 = vsub.f32 %v80, %v108
    %v113 = vmul.f32 %v44, %v109
    %v114 = vmul.f32 %v45, %v110
    %v115 = vmul.f32 %v46, %v111
    %v116 = vmul.f32 %v47, %v112
    %117 = vrot.lane.b32.xlu0 %v40, 64
    %v118 = vpop.permute.xlu0 %117
    %119 = vrot.lane.b32.xlu0 %v41, 64
    %v120 = vpop.permute.xlu0 %119
    %121 = vrot.lane.b32.xlu0 %v42, 64
    %v122 = vpop.permute.xlu0 %121
    %123 = vrot.lane.b32.xlu0 %v43, 64
    %v124 = vpop.permute.xlu0 %123
    %v129 = vsub.f32 %v40, %v118
    %v130 = vsub.f32 %v41, %v120
    %v131 = vsub.f32 %v42, %v122
    %v132 = vsub.f32 %v43, %v124
    %137 = vrot.lane.b32.xlu0 %v129, 96
    %v138 = vpop.permute.xlu0 %137
    %139 = vrot.lane.b32.xlu0 %v130, 96
    %v140 = vpop.permute.xlu0 %139
    %141 = vrot.lane.b32.xlu0 %v131, 96
    %v142 = vpop.permute.xlu0 %141
    %143 = vrot.lane.b32.xlu0 %v132, 96
    %v144 = vpop.permute.xlu0 %143
    %v149 = vadd.f32 %v113, %v138
    %v150 = vadd.f32 %v114, %v140
    %v151 = vadd.f32 %v115, %v142
    %v152 = vadd.f32 %v116, %v144
    %157 = vrot.lane.b32.xlu0 %v44, 96
    %v158 = vpop.permute.xlu0 %157
    %159 = vrot.lane.b32.xlu0 %v45, 96
    %v160 = vpop.permute.xlu0 %159
    %161 = vrot.lane.b32.xlu0 %v46, 96
    %v162 = vpop.permute.xlu0 %161
    %163 = vrot.lane.b32.xlu0 %v47, 96
    %v164 = vpop.permute.xlu0 %163
    %v169 = vadd.f32 %v149, %v158
    %v170 = vadd.f32 %v150, %v160
    %v171 = vadd.f32 %v151, %v162
    %v172 = vadd.f32 %v152, %v164
    %v173 = vadd.f32 %v169, 1e-06
    %v174 = vadd.f32 %v170, 1e-06
    %v175 = vadd.f32 %v171, 1e-06
    %v176 = vadd.f32 %v172, 1e-06
    %v177 = vlaneseq
    %v178 = vand.u32 %v177, 127
    %vm179 = vcmp.lt.s32.totalorder %v178, 16
    %v180 = vsel %vm179, 1, 0
    %vm181 = vcmp.eq.s32.totalorder %v180, 1
    %v182 = vsel %vm181, %v173, 0.0
    %v183 = vsel %vm181, %v174, 0.0
    %v184 = vsel %vm181, %v175, 0.0
    %v185 = vsel %vm181, %v176, 0.0
    %v186 = vmul.f32 %v182, %v182
    %v187 = vmul.f32 %v183, %v183
    %v188 = vmul.f32 %v184, %v184
    %v189 = vmul.f32 %v185, %v185
    %v190 = vsel %vm68, %v186, 0.0
    %191 = vadd.xlane.f32.xlu0 %v190
    %v192 = vpop.xlane.xlu0 %191
    %v193 = vsel %vm68, %v187, 0.0
    %194 = vadd.xlane.f32.xlu0 %v193
    %v195 = vpop.xlane.xlu0 %194
    %v196 = vsel %vm68, %v188, 0.0
    %197 = vadd.xlane.f32.xlu0 %v196
    %v198 = vpop.xlane.xlu0 %197
    %v199 = vsel %vm68, %v189, 0.0
    %200 = vadd.xlane.f32.xlu0 %v199
    %v201 = vpop.xlane.xlu0 %200
    %v202 = vrsqrt.pop %v192
    %v203 = vmul.f32 %v192, %v202
    %vm204 = vcmp.eq.f32.partialorder %v192, inf
    %v205 = vsel %vm204, %v192, %v203
    %vm206 = vcmp.eq.f32.partialorder %v192, 0.0
    %v207 = vand.u32 %v192, 2147483648
    %v208 = vsel %vm206, %v207, %v205
    %v209 = vrsqrt.pop %v195
    %v210 = vmul.f32 %v195, %v209
    %vm211 = vcmp.eq.f32.partialorder %v195, inf
    %v212 = vsel %vm211, %v195, %v210
    %vm213 = vcmp.eq.f32.partialorder %v195, 0.0
    %v214 = vand.u32 %v195, 2147483648
    %v215 = vsel %vm213, %v214, %v212
    %v216 = vrsqrt.pop %v198
    %v217 = vmul.f32 %v198, %v216
    %vm218 = vcmp.eq.f32.partialorder %v198, inf
    %v219 = vsel %vm218, %v198, %v217
    %vm220 = vcmp.eq.f32.partialorder %v198, 0.0
    %v221 = vand.u32 %v198, 2147483648
    %v222 = vsel %vm220, %v221, %v219
    %v223 = vrsqrt.pop %v201
    %v224 = vmul.f32 %v201, %v223
    %vm225 = vcmp.eq.f32.partialorder %v201, inf
    %v226 = vsel %vm225, %v201, %v224
    %vm227 = vcmp.eq.f32.partialorder %v201, 0.0
    %v228 = vand.u32 %v201, 2147483648
    %v229 = vsel %vm227, %v228, %v226
    %v230 = vadd.f32 %v215, %v222
    %v231 = vadd.f32 %v230, %v229
    %v232 = vmul.f32 %v231, 0.33333334
    %v233 = vsub.f32 %v208, %v232
    %v234 = vadd.f32 %v233, 1.0
    %v235 = vmax.f32 %v234, 0.0
    %vm236 = vcmask 7168
    %v237 = vsel %vm236, %v235, 0.0
    %238 = vadd.xlane.f32.xlu0 %v237
    %v239 = vpop.xlane.xlu0 %238
    %v240 = vrot.slane %v239, 4
    %v241 = vadd.f32 %v239, %v240
    %v242 = vrot.slane %v241, 2
    %v243 = vadd.f32 %v241, %v242
    %v244 = vrot.slane %v243, 1
    %v245 = vadd.f32 %v243, %v244
    %s246 = vtos %v245
    %v247 = vrcp.pop 8.0
    %s248 = vtos %v247
    %s249 = smul.f32 %s246, %s248
    %v250 = vstv %s249
    %vm251 = vcmask 0
    %252 = vst.msk [vmem:[#allocation7] sm:$0x1] %vm251, %v250
    // Predicated region
    $region18: #{tpu_custom_call.1} parent=1 // pred_check
      _
    $region19: #{tpu_custom_call.1} parent=1 // pred_check_branch
      %254 = sbr.rel (0) target = $region21
    $region20: #{tpu_custom_call.1} parent=1 // pred_region
      %s256 = ssub.s32 16, 16
      %257 = vsyncadd [#allocation4], %s256
      %s259 = sshll.u32 [#allocation7], 4
      %s260 = int_to_ptr.vmem [resolvable:$true] %s259
      %262 = dma.vmem_to_hbm [thread:$0]  %s260, 16, %s2, [#allocation4]
    $region21: #{tpu_custom_call.1} parent=1 // pred_fallthru
      _
    // Predicated region
    $region22: #{tpu_custom_call.1} parent=1 // pred_check
      _
    $region23: #{tpu_custom_call.1} parent=1 // pred_check_branch
      %264 = sbr.rel (0) target = $region25
    $region24: #{tpu_custom_call.1} parent=1 // pred_region
      %265 = dma.done [#allocation4], 16
    $region25: #{tpu_custom_call.1} parent=1 // pred_fallthru
      _
    %266 = vsyncpa [#allocation3], 1
    %267 = vsyncpa [#allocation6], 1
    %268 = vsyncpa [#allocation4], 1

</llo_original>
